<compile_context>
chip_gen: v5e
topology: v5e:2x2
jax: 0.10.0
libtpu: 0.0.40
codegen_flags: <defaults>
</compile_context>

<pallas_src>
import functools

import jax
import jax.numpy as jnp
from jax.experimental import pallas as pl
from jax.experimental.pallas import tpu as pltpu


# ------------------------------ planning helpers ------------------------------
def _round_up(n, m):
    return ((n + m - 1) // m) * m


def _vmem_plan():
    """Per-generation VMEM sizing (v7x: 64 MiB/TC, v5e/v6e: 128 MiB)."""
    cap = 64 * 1024 * 1024                                   # conservative fallback
    try:
        cap = int(getattr(pltpu.get_tpu_info(), "vmem_capacity_bytes", cap))
    except Exception:
        pass
    limit = min(cap * 3 // 4, 96 * 1024 * 1024)              # 48 MiB v7x / 96 MiB v5e,v6e
    emb_buf_budget = limit // 4                              # one emb buffer (double-buffered)
    chunk_budget = max(limit // 12, 2 * 1024 * 1024)         # live f32 temporaries per chunk
    return limit, emb_buf_budget, chunk_budget


def _plan_tiles(Q, NT, D, emb_buf_budget, chunk_budget):
    # N tile (lane axis of the output).  NT<=128 -> one full-width block, no padding;
    # otherwise pick from {512,384,256,128} minimizing padded junk columns.
    if NT <= 128:
        n_tile = n_pad = NT
    else:
        best = None
        for cand in (512, 384, 256, 128):
            pad = _round_up(NT, cand)
            if best is None or pad < best[1]:
                best = (cand, pad)
        n_tile, n_pad = best
    # Q tile: largest that keeps one bf16 emb buffer under budget.
    q_cap = _round_up(Q, 8)
    q_tile = 8
    for cand in (64, 32, 16, 8):
        if cand <= q_cap and cand * n_tile * D * 2 <= emb_buf_budget:
            q_tile = cand
            break
    q_pad = _round_up(Q, q_tile)
    # D chunk (multiple of 128 when chunking) bounds in-kernel f32 temporaries.
    d_chunk = D
    while d_chunk > 128 and q_tile * n_tile * d_chunk * 4 > chunk_budget:
        d_chunk = max(128, (d_chunk // 2) // 128 * 128)
    return q_pad, q_tile, n_pad, n_tile, d_chunk


# ------------------------------- Pallas kernel --------------------------------
def _l1_logit_kernel(pred_ref, emb_ref, out_ref, *, gamma, d_chunk):
    """out[q, n] = gamma - sum_d |emb[q, n, d] - pred[q, 0, d]|.

    emb arrives in its natural gather layout (Q_t, N_t, D): D on lanes, samples on
    sublanes.  pred (Q_t, 1, D) already has the same lane layout, so the broadcast
    over the sample axis is a cheap sublane broadcast (no per-step relayout).
    The D reduction is accumulated in f32 over static lane-aligned chunks so live
    temporaries stay bounded; gamma is folded into the accumulator init.
    """
    q_t, n_t, d = emb_ref.shape
    acc = jnp.full((q_t, n_t), gamma, dtype=jnp.float32)
    for lo in range(0, d, d_chunk):
        hi = min(lo + d_chunk, d)
        e = emb_ref[:, :, lo:hi].astype(jnp.float32)     # (q_t, n_t, c) bf16 -> f32 (VPU)
        p = pred_ref[:, :, lo:hi]                        # (q_t, 1,   c) f32, resident
        acc = acc - jnp.sum(jnp.abs(e - p), axis=-1)     # lane reduce over the D chunk
    out_ref[...] = acc


def l1_logit(gamma, pred3, emb, *, q_tile, n_tile, d_chunk, vmem_limit_bytes):
    """pred3: (q_pad, 1, D) f32; emb: (q_pad, n_pad, D) bf16/f32.  Returns (q_pad, n_pad) f32."""
    q_pad, _, D = pred3.shape
    _, n_pad, _ = emb.shape
    grid = (q_pad // q_tile, n_pad // n_tile)
    kernel = functools.partial(_l1_logit_kernel, gamma=float(gamma), d_chunk=d_chunk)
    cost = pl.CostEstimate(
        flops=3 * q_pad * n_pad * D,
        transcendentals=0,
        bytes_accessed=q_pad * n_pad * D * emb.dtype.itemsize
        + q_pad * D * 4 + q_pad * n_pad * 4,
    )
    return pl.pallas_call(
        kernel,
        out_shape=jax.ShapeDtypeStruct((q_pad, n_pad), jnp.float32),
        grid=grid,
        in_specs=[
            # pred tile stays resident across the N grid axis; layout matches emb.
            pl.BlockSpec((q_tile, 1, D), lambda q, n: (q, 0, 0)),
            # streamed embedding tile in natural gather layout (samples on sublanes, D on lanes).
            pl.BlockSpec((q_tile, n_tile, D), lambda q, n: (q, n, 0)),
        ],
        out_specs=pl.BlockSpec((q_tile, n_tile), lambda q, n: (q, n)),
        compiler_params=pltpu.CompilerParams(
            dimension_semantics=("parallel", "parallel"),   # both TCs get work on v7x
            vmem_limit_bytes=vmem_limit_bytes,
        ),
        cost_estimate=cost,
    )(pred3, emb)


# ---------------------------- Model (JAX glue) ---------------------------------
class GNNBasedModelJAX:
    """JAX/Pallas port of GNNBasedModel's parameter setup + calc_logit."""

    def __init__(self, num_entities, num_relations, hidden_dim, *, gamma=12.0,
                 dim_entity_embedding=None, seed=0, stream_dtype=jnp.bfloat16):
        self.num_entity = num_entities
        self.num_relation = num_relations
        self.hidden_dim = hidden_dim
        self.epsilon = 2.0
        self.gamma = jnp.array([gamma], dtype=jnp.float32)
        self._gamma_f = float(gamma)                      # static per model: baked into kernel
        self.embedding_range = jnp.array(
            [(gamma + self.epsilon) / hidden_dim], dtype=jnp.float32)
        self.stream_dtype = stream_dtype

        d_ent = dim_entity_embedding if dim_entity_embedding is not None else hidden_dim
        key = jax.random.PRNGKey(seed)
        k_ent, k_rel = jax.random.split(key)
        r = float(self.embedding_range[0])
        # nn.init.uniform_(weight, a=-r, b=r), deterministic in-script init.
        self.entity_embedding = jax.random.uniform(
            k_ent, (num_entities, d_ent), dtype=jnp.float32, minval=-r, maxval=r)
        self.relation_embedding = jax.random.uniform(
            k_rel, (num_relations, hidden_dim), dtype=jnp.float32, minval=-r, maxval=r)
        # bf16 streaming copy stored ONCE: the per-call gather moves half the bytes
        # and no astype pass over the gathered (Q, NT, D) array is needed.
        self.entity_embedding_stream = self.entity_embedding.astype(stream_dtype)

        self._vmem_limit, self._emb_buf_budget, self._chunk_budget = _vmem_plan()

    def calc_logit(self, x, target_node_idxes, positive_samples, negative_samples):
        """x: (num_nodes, D); target_node_idxes: (Q,) int32;
        positive_samples: (Q,) int32; negative_samples: (Q, N) int32.
        Returns (positive_logit (Q,1), negative_logit (Q,N)) — matches PyTorch shapes.
        """
        Q = positive_samples.shape[0]
        N = negative_samples.shape[1]
        NT = 1 + N
        D = self.entity_embedding_stream.shape[1]

        q_pad, q_tile, n_pad, n_tile, d_chunk = _plan_tiles(
            Q, NT, D, self._emb_buf_budget, self._chunk_budget)

        # Fuse pos + neg samples (column 0 = positive).  Pad the INDEX arrays
        # (cheap, int32), not the gathered data; pad entries clamp to valid row 0
        # and the padded logits are sliced off below.
        samples = jnp.concatenate([positive_samples[:, None], negative_samples], axis=1)
        if q_pad != Q or n_pad != NT:
            samples = jnp.pad(samples, ((0, q_pad - Q), (0, n_pad - NT)))
        tni = target_node_idxes
        if q_pad != Q:
            tni = jnp.pad(tni, (0, q_pad - Q))

        # Glue: embedding gathers stay in XLA, directly producing the kernel's
        # natural (Q, NT, D) bf16 layout (no transpose / cast / data-pad passes).
        pred3 = jnp.take(x, tni, axis=0).astype(jnp.float32)[:, None, :]   # (q_pad, 1, D)
        emb = jnp.take(self.entity_embedding_stream, samples, axis=0)      # (q_pad, n_pad, D)
        # TODO(synk): moving this gather in-kernel (scalar-prefetch of `samples` +
        # per-row DMAs from an HBM-resident bf16 table) would skip the HBM round
        # trip of the gathered array entirely; not done here.

        logits = l1_logit(self._gamma_f, pred3, emb,
                          q_tile=q_tile, n_tile=n_tile, d_chunk=d_chunk,
                          vmem_limit_bytes=self._vmem_limit)               # (q_pad, n_pad)
        logits = logits[:Q, :NT]
        positive_logit = logits[:, :1]                                     # (Q, 1)
        negative_logit = logits[:, 1:]                                     # (Q, N)
        return positive_logit, negative_logit

    # TODO(synk): forward(graph) is abstract (NotImplementedError) in the reference
    # module, so only the calc_logit compute path is implemented.
    # TODO(synk): the disjunctive/union test-mode branch (query_idx_to_union_nodes)
    # is dict-driven Python control flow and is not ported.


# ----------------------------------- Main --------------------------------------
if __name__ == "__main__":
    num_entities = 64
    num_relations = 8
    hidden_dim = 32
    num_nodes = 12      # nodes produced by the (unimplemented) GNN forward
    Q = 8               # queries
    N = 16              # negative samples per query

    model = GNNBasedModelJAX(num_entities, num_relations, hidden_dim,
                             gamma=12.0, seed=0)

    key = jax.random.PRNGKey(0)
    kx, kt, kp, kn = jax.random.split(key, 4)
    # x plays the role of the last-layer GNN node embeddings.
    x = jax.random.normal(kx, (num_nodes, hidden_dim), dtype=jnp.float32)
    target_node_idxes = jax.random.randint(kt, (Q,), 0, num_nodes, dtype=jnp.int32)
    positive_samples = jax.random.randint(kp, (Q,), 0, num_entities, dtype=jnp.int32)
    negative_samples = jax.random.randint(kn, (Q, N), 0, num_entities, dtype=jnp.int32)

    pos_logit, neg_logit = model.calc_logit(
        x, target_node_idxes, positive_samples, negative_samples)
    jax.block_until_ready((pos_logit, neg_logit))

    # Reference check (plain JAX), mirroring the kernel's bf16 table / f32 math.
    pred_ref = jnp.take(x, target_node_idxes, axis=0)[:, None, :]          # (Q, 1, D) f32
    ent_b = model.entity_embedding_stream.astype(jnp.float32)
    pos_ref = model.gamma - jnp.sum(
        jnp.abs(jnp.take(ent_b, positive_samples, axis=0)[:, None, :] - pred_ref),
        axis=-1)
    neg_ref = model.gamma - jnp.sum(
        jnp.abs(jnp.take(ent_b, negative_samples, axis=0) - pred_ref), axis=-1)

    assert pos_logit.shape == (Q, 1) and neg_logit.shape == (Q, N)
    assert jnp.allclose(pos_logit, pos_ref, atol=1e-3, rtol=1e-3)
    assert jnp.allclose(neg_logit, neg_ref, atol=1e-3, rtol=1e-3)
    print("KERNEL_OK")
</pallas_src>

<mosaic_0001>
module attributes {stable_mosaic.version = 11 : i64} {
  func.func @_l1_logit_kernel(%arg0: i32, %arg1: i32, %arg2: memref<8x1x32xf32, #tpu.memory_space<vmem>>, %arg3: memref<8x17x32xbf16, #tpu.memory_space<vmem>>, %arg4: memref<8x17xf32, #tpu.memory_space<vmem>>) attributes {dimension_semantics = [#tpu.dimension_semantics<parallel>, #tpu.dimension_semantics<parallel>], iteration_bounds = array<i64: 1, 1>, scalar_prefetch = 0 : i64, scratch_operands = 0 : i64, tpu.core_type = #tpu.core_type<tc>, window_params = [{transform_indices = @transform_0, window_bounds = array<i64: 8, 1, 32>}, {transform_indices = @transform_1, window_bounds = array<i64: 8, 17, 32>}, {transform_indices = @transform_2, window_bounds = array<i64: 8, 17>}]} {
    %cst = arith.constant 1.200000e+01 : f32
    %0 = vector.broadcast %cst : f32 to vector<8x17xf32>
    %c0 = arith.constant 0 : index
    %c0_0 = arith.constant 0 : index
    %c0_1 = arith.constant 0 : index
    %1 = vector.load %arg3[%c0, %c0_0, %c0_1] : memref<8x17x32xbf16, #tpu.memory_space<vmem>>, vector<8x17x32xbf16>
    %2 = arith.extf %1 : vector<8x17x32xbf16> to vector<8x17x32xf32>
    %c0_2 = arith.constant 0 : index
    %c0_3 = arith.constant 0 : index
    %c0_4 = arith.constant 0 : index
    %3 = vector.load %arg2[%c0_2, %c0_3, %c0_4] : memref<8x1x32xf32, #tpu.memory_space<vmem>>, vector<8x1x32xf32>
    %4 = vector.broadcast %3 : vector<8x1x32xf32> to vector<8x17x32xf32>
    %5 = arith.subf %2, %4 : vector<8x17x32xf32>
    %6 = math.absf %5 : vector<8x17x32xf32>
    %cst_5 = arith.constant dense<0.000000e+00> : vector<8x17xf32>
    %7 = vector.multi_reduction <add>, %6, %cst_5 [2] : vector<8x17x32xf32> to vector<8x17xf32>
    %8 = arith.subf %0, %7 : vector<8x17xf32>
    %c0_6 = arith.constant 0 : index
    %c0_7 = arith.constant 0 : index
    %9 = vector.load %arg4[%c0_6, %c0_7] : memref<8x17xf32, #tpu.memory_space<vmem>>, vector<8x17xf32>
    tpu.vector_store %arg4[%c0_6, %c0_7], %8 {strides = array<i32>} : memref<8x17xf32, #tpu.memory_space<vmem>>, vector<8x17xf32>,
    return
  }
  func.func @transform_0(%arg0: i32, %arg1: i32) -> (i32, i32, i32) {
    %c0_i32 = arith.constant 0 : i32
    %c0_i32_0 = arith.constant 0 : i32
    %c0_i32_1 = arith.constant 0 : i32
    return %arg0, %c0_i32, %c0_i32_0 : i32, i32, i32
  }
  func.func @transform_1(%arg0: i32, %arg1: i32) -> (i32, i32, i32) {
    %c0_i32 = arith.constant 0 : i32
    %c0_i32_0 = arith.constant 0 : i32
    return %arg0, %arg1, %c0_i32 : i32, i32, i32
  }
  func.func @transform_2(%arg0: i32, %arg1: i32) -> (i32, i32) {
    %c0_i32 = arith.constant 0 : i32
    return %arg0, %arg1 : i32, i32
  }
}

</mosaic_0001>

<llo_original>
// kernel: tpu_custom_call.1
$region0: #{tpu_custom_call.1}
  #allocation0 [shape = 'u32[]', space=smem, size = 0x4, offset = 0x4, fixed_abs, tag = 'smem constant byte address 0x4 - core index']
  #allocation1 [shape = 'u32[72,128]{1,0:T(1,128)}', space=vmem, size = 0x9000, scoped, tag = 'internal scratch']
  %s0 = inlined_call_operand.vmem [shape: f32[8,1,32], index: 0, kind: input, shape index: {}]
  %s1 = inlined_call_operand.vmem [shape: bf16[8,17,32], index: 1, kind: input, shape index: {}]
  %s2 = inlined_call_operand.hbm [shape: f32[8,17], index: 2, kind: output, shape index: {}]
  %s3 = sld [smem:[#allocation0]]
  $region18: #{tpu_custom_call.1} parent=0
    _
  %s5 = ssub.s32 1, %s3
  %s6 = scalar_select 0, %s5, %s3
  $region1: #{tpu_custom_call.1} parent=0
    #allocation2 [shape = 'u8[4096]{0}', space=vmem, size = 0x1000, scoped, tag = 'output window, operand 0, single buffered']
    #allocation3 [shape = 's32[1]{0}', space=sflag, size = 0x4, scoped, tag = 'scoped memory for tpu_custom_call.1']
    %7 = vsyncpa [#allocation3], 0
    // Predicated region
    $region2: #{tpu_custom_call.1} parent=1 // pred_check
      _
    $region3: #{tpu_custom_call.1} parent=1 // pred_check_branch
      %9 = sbr.rel (0) target = $region5
    $region4: #{tpu_custom_call.1} parent=1 // pred_region
      _
    $region5: #{tpu_custom_call.1} parent=1 // pred_fallthru
      _
    // Predicated region
    $region6: #{tpu_custom_call.1} parent=1 // pred_check
      _
    $region7: #{tpu_custom_call.1} parent=1 // pred_check_branch
      %11 = sbr.rel (0) target = $region9
    $region8: #{tpu_custom_call.1} parent=1 // pred_region
      _
    $region9: #{tpu_custom_call.1} parent=1 // pred_fallthru
      _
    %v12 = vld [vmem:[%s1] sm:$0xf]
    %v13 = vld [vmem:[%s1 + $0x4] sm:$0xf]
    %v14 = vld [vmem:[%s1 + $0x8] sm:$0x1]
    %v15 = vld [vmem:[%s1 + $0xc] sm:$0xf]
    %v16 = vld [vmem:[%s1 + $0x10] sm:$0xf]
    %v17 = vld [vmem:[%s1 + $0x14] sm:$0x1]
    %v18 = vld [vmem:[%s1 + $0x18] sm:$0xf]
    %v19 = vld [vmem:[%s1 + $0x1c] sm:$0xf]
    %v20 = vld [vmem:[%s1 + $0x20] sm:$0x1]
    %v21 = vld [vmem:[%s1 + $0x24] sm:$0xf]
    %v22 = vld [vmem:[%s1 + $0x28] sm:$0xf]
    %v23 = vld [vmem:[%s1 + $0x2c] sm:$0x1]
    %v24 = vld [vmem:[%s1 + $0x30] sm:$0xf]
    %v25 = vld [vmem:[%s1 + $0x34] sm:$0xf]
    %v26 = vld [vmem:[%s1 + $0x38] sm:$0x1]
    %v27 = vld [vmem:[%s1 + $0x3c] sm:$0xf]
    %v28 = vld [vmem:[%s1 + $0x40] sm:$0xf]
    %v29 = vld [vmem:[%s1 + $0x44] sm:$0x1]
    %v30 = vld [vmem:[%s1 + $0x48] sm:$0xf]
    %v31 = vld [vmem:[%s1 + $0x4c] sm:$0xf]
    %v32 = vld [vmem:[%s1 + $0x50] sm:$0x1]
    %v33 = vld [vmem:[%s1 + $0x54] sm:$0xf]
    %v34 = vld [vmem:[%s1 + $0x58] sm:$0xf]
    %v35 = vld [vmem:[%s1 + $0x5c] sm:$0x1]
    %v36 = vunpack.c.l.bf16 %v12
    %v37 = vunpack.c.l.bf16 %v13
    %v38 = vunpack.c.l.bf16 %v14
    %v39 = vunpack.c.l.bf16 %v15
    %v40 = vunpack.c.l.bf16 %v16
    %v41 = vunpack.c.l.bf16 %v17
    %v42 = vunpack.c.l.bf16 %v18
    %v43 = vunpack.c.l.bf16 %v19
    %v44 = vunpack.c.l.bf16 %v20
    %v45 = vunpack.c.l.bf16 %v21
    %v46 = vunpack.c.l.bf16 %v22
    %v47 = vunpack.c.l.bf16 %v23
    %v48 = vunpack.c.l.bf16 %v24
    %v49 = vunpack.c.l.bf16 %v25
    %v50 = vunpack.c.l.bf16 %v26
    %v51 = vunpack.c.l.bf16 %v27
    %v52 = vunpack.c.l.bf16 %v28
    %v53 = vunpack.c.l.bf16 %v29
    %v54 = vunpack.c.l.bf16 %v30
    %v55 = vunpack.c.l.bf16 %v31
    %v56 = vunpack.c.l.bf16 %v32
    %v57 = vunpack.c.l.bf16 %v33
    %v58 = vunpack.c.l.bf16 %v34
    %v59 = vunpack.c.l.bf16 %v35
    %v60 = vld [vmem:[%s0] sm:$0x1]
    %v61 = vld [vmem:[%s0 + $0x1] sm:$0x1]
    %v62 = vld [vmem:[%s0 + $0x2] sm:$0x1]
    %v63 = vld [vmem:[%s0 + $0x3] sm:$0x1]
    %v64 = vld [vmem:[%s0 + $0x4] sm:$0x1]
    %v65 = vld [vmem:[%s0 + $0x5] sm:$0x1]
    %v66 = vld [vmem:[%s0 + $0x6] sm:$0x1]
    %v67 = vld [vmem:[%s0 + $0x7] sm:$0x1]
    %v76 = vperm.slane %v60, 0
    %v77 = vperm.slane %v61, 0
    %v78 = vperm.slane %v62, 0
    %v79 = vperm.slane %v63, 0
    %v80 = vperm.slane %v64, 0
    %v81 = vperm.slane %v65, 0
    %v82 = vperm.slane %v66, 0
    %v83 = vperm.slane %v67, 0
    %v92 = vsub.f32 %v36, %v76
    %v93 = vsub.f32 %v37, %v76
    %v94 = vsub.f32 %v38, %v76
    %v95 = vsub.f32 %v39, %v77
    %v96 = vsub.f32 %v40, %v77
    %v97 = vsub.f32 %v41, %v77
    %v98 = vsub.f32 %v42, %v78
    %v99 = vsub.f32 %v43, %v78
    %v100 = vsub.f32 %v44, %v78
    %v101 = vsub.f32 %v45, %v79
    %v102 = vsub.f32 %v46, %v79
    %v103 = vsub.f32 %v47, %v79
    %v104 = vsub.f32 %v48, %v80
    %v105 = vsub.f32 %v49, %v80
    %v106 = vsub.f32 %v50, %v80
    %v107 = vsub.f32 %v51, %v81
    %v108 = vsub.f32 %v52, %v81
    %v109 = vsub.f32 %v53, %v81
    %v110 = vsub.f32 %v54, %v82
    %v111 = vsub.f32 %v55, %v82
    %v112 = vsub.f32 %v56, %v82
    %v113 = vsub.f32 %v57, %v83
    %v114 = vsub.f32 %v58, %v83
    %v115 = vsub.f32 %v59, %v83
    %v116 = vand.u32 2147483647, %v92
    %v117 = vand.u32 2147483647, %v93
    %v118 = vand.u32 2147483647, %v94
    %v119 = vand.u32 2147483647, %v95
    %v120 = vand.u32 2147483647, %v96
    %v121 = vand.u32 2147483647, %v97
    %v122 = vand.u32 2147483647, %v98
    %v123 = vand.u32 2147483647, %v99
    %v124 = vand.u32 2147483647, %v100
    %v125 = vand.u32 2147483647, %v101
    %v126 = vand.u32 2147483647, %v102
    %v127 = vand.u32 2147483647, %v103
    %v128 = vand.u32 2147483647, %v104
    %v129 = vand.u32 2147483647, %v105
    %v130 = vand.u32 2147483647, %v106
    %v131 = vand.u32 2147483647, %v107
    %v132 = vand.u32 2147483647, %v108
    %v133 = vand.u32 2147483647, %v109
    %v134 = vand.u32 2147483647, %v110
    %v135 = vand.u32 2147483647, %v111
    %v136 = vand.u32 2147483647, %v112
    %v137 = vand.u32 2147483647, %v113
    %v138 = vand.u32 2147483647, %v114
    %v139 = vand.u32 2147483647, %v115
    %vm140 = vcmask 261120
    %v141 = vsel %vm140, %v116, 0.0
    %142 = vadd.xlane.f32.xlu0 %v141
    %v143 = vpop.xlane.xlu0 %142
    %v144 = vsel %vm140, %v117, 0.0
    %145 = vadd.xlane.f32.xlu0 %v144
    %v146 = vpop.xlane.xlu0 %145
    %vm147 = vcmask 253952
    %v148 = vsel %vm147, %v118, 0.0
    %149 = vadd.xlane.f32.xlu0 %v148
    %v150 = vpop.xlane.xlu0 %149
    %v151 = vsel %vm140, %v119, 0.0
    %152 = vadd.xlane.f32.xlu0 %v151
    %v153 = vpop.xlane.xlu0 %152
    %v154 = vsel %vm140, %v120, 0.0
    %155 = vadd.xlane.f32.xlu0 %v154
    %v156 = vpop.xlane.xlu0 %155
    %v157 = vsel %vm147, %v121, 0.0
    %158 = vadd.xlane.f32.xlu0 %v157
    %v159 = vpop.xlane.xlu0 %158
    %v160 = vsel %vm140, %v122, 0.0
    %161 = vadd.xlane.f32.xlu0 %v160
    %v162 = vpop.xlane.xlu0 %161
    %v163 = vsel %vm140, %v123, 0.0
    %164 = vadd.xlane.f32.xlu0 %v163
    %v165 = vpop.xlane.xlu0 %164
    %v166 = vsel %vm147, %v124, 0.0
    %167 = vadd.xlane.f32.xlu0 %v166
    %v168 = vpop.xlane.xlu0 %167
    %v169 = vsel %vm140, %v125, 0.0
    %170 = vadd.xlane.f32.xlu0 %v169
    %v171 = vpop.xlane.xlu0 %170
    %v172 = vsel %vm140, %v126, 0.0
    %173 = vadd.xlane.f32.xlu0 %v172
    %v174 = vpop.xlane.xlu0 %173
    %v175 = vsel %vm147, %v127, 0.0
    %176 = vadd.xlane.f32.xlu0 %v175
    %v177 = vpop.xlane.xlu0 %176
    %v178 = vsel %vm140, %v128, 0.0
    %179 = vadd.xlane.f32.xlu0 %v178
    %v180 = vpop.xlane.xlu0 %179
    %v181 = vsel %vm140, %v129, 0.0
    %182 = vadd.xlane.f32.xlu0 %v181
    %v183 = vpop.xlane.xlu0 %182
    %v184 = vsel %vm147, %v130, 0.0
    %185 = vadd.xlane.f32.xlu0 %v184
    %v186 = vpop.xlane.xlu0 %185
    %v187 = vsel %vm140, %v131, 0.0
    %188 = vadd.xlane.f32.xlu0 %v187
    %v189 = vpop.xlane.xlu0 %188
    %v190 = vsel %vm140, %v132, 0.0
    %191 = vadd.xlane.f32.xlu0 %v190
    %v192 = vpop.xlane.xlu0 %191
    %v193 = vsel %vm147, %v133, 0.0
    %194 = vadd.xlane.f32.xlu0 %v193
    %v195 = vpop.xlane.xlu0 %194
    %v196 = vsel %vm140, %v134, 0.0
    %197 = vadd.xlane.f32.xlu0 %v196
    %v198 = vpop.xlane.xlu0 %197
    %v199 = vsel %vm140, %v135, 0.0
    %200 = vadd.xlane.f32.xlu0 %v199
    %v201 = vpop.xlane.xlu0 %200
    %v202 = vsel %vm147, %v136, 0.0
    %203 = vadd.xlane.f32.xlu0 %v202
    %v204 = vpop.xlane.xlu0 %203
    %v205 = vsel %vm140, %v137, 0.0
    %206 = vadd.xlane.f32.xlu0 %v205
    %v207 = vpop.xlane.xlu0 %206
    %v208 = vsel %vm140, %v138, 0.0
    %209 = vadd.xlane.f32.xlu0 %v208
    %v210 = vpop.xlane.xlu0 %209
    %v211 = vsel %vm147, %v139, 0.0
    %212 = vadd.xlane.f32.xlu0 %v211
    %v213 = vpop.xlane.xlu0 %212
    %v214 = vsub.f32 12.0, %v143
    %v215 = vsub.f32 12.0, %v146
    %v216 = vsub.f32 12.0, %v150
    %v217 = vsub.f32 12.0, %v153
    %v218 = vsub.f32 12.0, %v156
    %v219 = vsub.f32 12.0, %v159
    %v220 = vsub.f32 12.0, %v162
    %v221 = vsub.f32 12.0, %v165
    %v222 = vsub.f32 12.0, %v168
    %v223 = vsub.f32 12.0, %v171
    %v224 = vsub.f32 12.0, %v174
    %v225 = vsub.f32 12.0, %v177
    %v226 = vsub.f32 12.0, %v180
    %v227 = vsub.f32 12.0, %v183
    %v228 = vsub.f32 12.0, %v186
    %v229 = vsub.f32 12.0, %v189
    %v230 = vsub.f32 12.0, %v192
    %v231 = vsub.f32 12.0, %v195
    %v232 = vsub.f32 12.0, %v198
    %v233 = vsub.f32 12.0, %v201
    %v234 = vsub.f32 12.0, %v204
    %v235 = vsub.f32 12.0, %v207
    %v236 = vsub.f32 12.0, %v210
    %v237 = vsub.f32 12.0, %v213
    %v262 = vlaneseq
    %v263 = vand.u32 %v262, 127
    %v264 = vperm.slane %v214, %v263
    %v265 = vadd.s32 %v263, 4294967288
    %v266 = vperm.slane %v215, %v265
    %vm267 = vcmask 130112
    %v268 = vsel %vm267, %v266, %v264
    %v269 = vadd.s32 %v263, 4294967280
    %v270 = vperm.slane %v216, %v269
    %vm271 = vcmask 195712
    %v272 = vsel %vm271, %v270, %v268
    %v273 = vperm.slane %v217, %v263
    %v274 = vperm.slane %v218, %v265
    %v275 = vsel %vm267, %v274, %v273
    %v276 = vperm.slane %v219, %v269
    %v277 = vsel %vm271, %v276, %v275
    %v278 = vperm.slane %v220, %v263
    %v279 = vperm.slane %v221, %v265
    %v280 = vsel %vm267, %v279, %v278
    %v281 = vperm.slane %v222, %v269
    %v282 = vsel %vm271, %v281, %v280
    %v283 = vperm.slane %v223, %v263
    %v284 = vperm.slane %v224, %v265
    %v285 = vsel %vm267, %v284, %v283
    %v286 = vperm.slane %v225, %v269
    %v287 = vsel %vm271, %v286, %v285
    %v288 = vperm.slane %v226, %v263
    %v289 = vperm.slane %v227, %v265
    %v290 = vsel %vm267, %v289, %v288
    %v291 = vperm.slane %v228, %v269
    %v292 = vsel %vm271, %v291, %v290
    %v293 = vperm.slane %v229, %v263
    %v294 = vperm.slane %v230, %v265
    %v295 = vsel %vm267, %v294, %v293
    %v296 = vperm.slane %v231, %v269
    %v297 = vsel %vm271, %v296, %v295
    %v298 = vperm.slane %v232, %v263
    %v299 = vperm.slane %v233, %v265
    %v300 = vsel %vm267, %v299, %v298
    %v301 = vperm.slane %v234, %v269
    %v302 = vsel %vm271, %v301, %v300
    %v303 = vperm.slane %v235, %v263
    %v304 = vperm.slane %v236, %v265
    %v305 = vsel %vm267, %v304, %v303
    %v306 = vperm.slane %v237, %v269
    %v307 = vsel %vm271, %v306, %v305
    %vm308 = vcmask 1041409
    %v309 = vsel %vm308, %v277, %v272
    %vm310 = vcmask 1042434
    %v311 = vsel %vm310, %v282, %v309
    %vm312 = vcmask 1043459
    %v313 = vsel %vm312, %v287, %v311
    %vm314 = vcmask 1044484
    %v315 = vsel %vm314, %v292, %v313
    %vm316 = vcmask 1045509
    %v317 = vsel %vm316, %v297, %v315
    %vm318 = vcmask 1046534
    %v319 = vsel %vm318, %v302, %v317
    %vm320 = vcmask 1047559
    %v321 = vsel %vm320, %v307, %v319
    %vm323 = vcmask 138240
    %324 = vst.msk [vmem:[#allocation2] sm:$0xff] %vm323, %v321
    // Predicated region
    $region10: #{tpu_custom_call.1} parent=1 // pred_check
      _
    $region11: #{tpu_custom_call.1} parent=1 // pred_check_branch
      %326 = sbr.rel (0) target = $region13
    $region12: #{tpu_custom_call.1} parent=1 // pred_region
      %328 = vsyncadd [#allocation3], 0
      %s330 = sshll.u32 [#allocation2], 4
      %s331 = int_to_ptr.vmem [resolvable:$true] %s330
      %s332 = sshll.u32 %s2, 4
      %s333 = int_to_ptr.hbm [resolvable:$true] %s332
      %335 = dma.vmem_to_hbm [thread:$0]  %s331, 128, %s333, [#allocation3]
    $region13: #{tpu_custom_call.1} parent=1 // pred_fallthru
      _
    // Predicated region
    $region14: #{tpu_custom_call.1} parent=1 // pred_check
      _
    $region15: #{tpu_custom_call.1} parent=1 // pred_check_branch
      %337 = sbr.rel (0) target = $region17
    $region16: #{tpu_custom_call.1} parent=1 // pred_region
      %339 = dma.done [#allocation3], 128
    $region17: #{tpu_custom_call.1} parent=1 // pred_fallthru
      _
    %340 = vsyncpa [#allocation3], 1

</llo_original>
